<compile_context>
chip_gen: v6e
topology: v6e:2x2x1
jax: 0.10.0
libtpu: 0.0.40
codegen_flags: <defaults>
</compile_context>

<pallas_src>
import numpy as np
import jax
import jax.numpy as jnp
from jax.experimental import pallas as pl
from jax.experimental.pallas import tpu as pltpu

# ---- synthetic inner-model sizes (small, consistent with a node model) ------
B, N = 2, 8              # batch, nodes
D_IN = 32                # net_input feature dim
D_OUT = 32               # model output dim (self_cond has this shape too)
D_COND = 16              # neg_cond feature dim
HIDDEN = 64              # hidden width
K_BASE = D_IN + D_COND   # merged first-layer contraction dim (= ones-column index)
PAD = 128                # lane-dense padded width for K, HIDDEN and the output


# -----------------------------------------------------------------------------
# Kernels (grid-less, whole arrays resident in VMEM)
# -----------------------------------------------------------------------------
def _fused_selfcond_kernel(acts_ref, w_ref, o_ref):
    """Both self-conditioning passes fused into one kernel.

    acts : (R, 256)  cols [0:128) = [x | cond | 1 | 0...], cols [128:256) = flags
    w    : (384, 128) rows [0:128) = W_base(+b1 folded), [128:256) = W_sc,
                      rows [256:384) = W_out(+b2 folded)
    o    : (R, 128)   first D_OUT columns are the model output
    """
    xc = acts_ref[:, 0:PAD]            # (R, 128) lane-aligned static slice
    flags = acts_ref[:, PAD:2 * PAD]   # (R, 128) lane-dense flags
    w_base = w_ref[0:PAD, :]
    w_sc = w_ref[PAD:2 * PAD, :]
    w_out = w_ref[2 * PAD:3 * PAD, :]

    # Shared first layer (bias folded in; the self_cond term is zero on pass 1).
    h_base = jnp.dot(xc, w_base, preferred_element_type=jnp.float32)

    # Pass 1: self_cond = model(x, flags, cond, None) — stays in registers/VMEM.
    sc = jnp.dot(jnp.maximum(h_base, 0.0), w_out,
                 preferred_element_type=jnp.float32) * flags

    # Pass 2: output = model(x, flags, cond, self_cond).
    h2 = jnp.maximum(
        h_base + jnp.dot(sc, w_sc, preferred_element_type=jnp.float32), 0.0)
    o_ref[...] = (jnp.dot(h2, w_out, preferred_element_type=jnp.float32)
                  * flags).astype(o_ref.dtype)


def _single_pass_kernel(acts_ref, w_ref, o_ref):
    """Model with self_cond=None, specialized: no self_cond weights at all."""
    xc = acts_ref[:, 0:PAD]
    flags = acts_ref[:, PAD:2 * PAD]
    h = jnp.maximum(jnp.dot(xc, w_ref[0:PAD, :],
                            preferred_element_type=jnp.float32), 0.0)
    o_ref[...] = (jnp.dot(h, w_ref[PAD:2 * PAD, :],
                          preferred_element_type=jnp.float32)
                  * flags).astype(o_ref.dtype)


# -----------------------------------------------------------------------------
# pallas_call plumbing
# -----------------------------------------------------------------------------
_VMEM_SPEC = pl.BlockSpec(memory_space=pltpu.MemorySpace.VMEM)


def _call_kernel(kernel, acts, slab):
    r = acts.shape[0]
    return pl.pallas_call(
        kernel,
        out_shape=jax.ShapeDtypeStruct((r, PAD), jnp.float32),
        in_specs=[_VMEM_SPEC, _VMEM_SPEC],
        out_specs=_VMEM_SPEC,
    )(acts, slab)


def _prep_acts(net_input, node_flags, neg_cond):
    """Pack [x | cond | 1 | 0-pad | flags-broadcast] into one (R, 256) slab."""
    b, n, d_in = net_input.shape
    r = b * n
    x = net_input.reshape(r, d_in)
    cond = jnp.broadcast_to(neg_cond[:, None, :], (b, n, D_COND)).reshape(r, D_COND)
    ones = jnp.ones((r, 1), net_input.dtype)                       # ones column (bias fold)
    zpad = jnp.zeros((r, PAD - (d_in + D_COND + 1)), net_input.dtype)
    flags = jnp.broadcast_to(node_flags.reshape(r, 1).astype(net_input.dtype),
                             (r, PAD))                             # lane-dense flags
    return jnp.concatenate([x, cond, ones, zpad, flags], axis=-1)  # (R, 2*PAD)


@jax.jit
def _forward_fused(net_input, node_flags, neg_cond, slab_fused):
    b, n, _ = net_input.shape
    acts = _prep_acts(net_input, node_flags, neg_cond)
    out = _call_kernel(_fused_selfcond_kernel, acts, slab_fused)
    return out[:, :D_OUT].reshape(b, n, D_OUT)


@jax.jit
def _forward_single(net_input, node_flags, neg_cond, slab_single):
    b, n, _ = net_input.shape
    acts = _prep_acts(net_input, node_flags, neg_cond)
    out = _call_kernel(_single_pass_kernel, acts, slab_single)
    return out[:, :D_OUT].reshape(b, n, D_OUT)


# -----------------------------------------------------------------------------
# One-time weight packing (lane-dense 128-wide slabs; biases folded in)
# -----------------------------------------------------------------------------
def _pack_params(params):
    w_in = params["w_in"]; w_cond = params["w_cond"]; w_sc = params["w_sc"]
    w_out = params["w_out"]; b1 = params["b1"]; b2 = params["b2"]

    # First-layer block: rows 0..31 = W_in, 32..47 = W_cond, row 48 = b1 plus a
    # 1.0 at hidden column HIDDEN (keeps the ones-column alive for the b2 fold).
    w_base = jnp.zeros((PAD, PAD), jnp.float32)
    w_base = w_base.at[:D_IN, :HIDDEN].set(w_in)
    w_base = w_base.at[D_IN:D_IN + D_COND, :HIDDEN].set(w_cond)
    w_base = w_base.at[K_BASE, :HIDDEN].set(b1[0])
    w_base = w_base.at[K_BASE, HIDDEN].set(1.0)

    # Self-cond feedback block: rows 0..31 = W_sc (padded cols/rows are zero, so
    # they never disturb the ones-column or the padded output lanes).
    w_sc_p = jnp.zeros((PAD, PAD), jnp.float32)
    w_sc_p = w_sc_p.at[:D_OUT, :HIDDEN].set(w_sc)

    # Output block: rows 0..63 = W_out, row 64 = b2; padded output columns are
    # exactly zero (invariant required for the 128-lane output slicing).
    w_out_a = jnp.zeros((PAD, PAD), jnp.float32)
    w_out_a = w_out_a.at[:HIDDEN, :D_OUT].set(w_out)
    w_out_a = w_out_a.at[HIDDEN, :D_OUT].set(b2[0])

    slab_fused = jnp.concatenate([w_base, w_sc_p, w_out_a], axis=0)   # (384, 128)
    slab_single = jnp.concatenate([w_base, w_out_a], axis=0)          # (256, 128)
    return slab_fused, slab_single


# -----------------------------------------------------------------------------
# Synthetic inner model + SelfCondWrapper (same forward control flow as PyTorch)
# -----------------------------------------------------------------------------
class InnerModel:
    """Synthetic wrapped model; self_cond=None means zero self-conditioning."""

    def __init__(self, params):
        self.slab_fused, self.slab_single = _pack_params(params)

    def __call__(self, net_input, node_flags, neg_cond, self_cond=None, **kw):
        if self_cond is not None:
            # TODO(synk): an externally supplied self_cond tensor is never produced
            # by SelfCondWrapper (it uses the fused path below), so this variant is
            # not implemented.
            raise NotImplementedError("explicit self_cond path not implemented")
        return _forward_single(net_input, node_flags, neg_cond, self.slab_single)

    def forward_self_cond_fused(self, net_input, node_flags, neg_cond, **kw):
        """model(x,...,None) followed by model(x,...,self_cond) — one fused kernel."""
        return _forward_fused(net_input, node_flags, neg_cond, self.slab_fused)


class SelfCondWrapper:
    """Same forward control flow as the PyTorch module."""

    def __init__(self, model, self_condition):
        self.model = model
        self.self_condition = self_condition
        self.last_took_self_cond = False

    def __call__(self, net_input, node_flags, neg_cond, **model_kwargs):
        take = bool(self.self_condition) and (np.random.rand() < 0.5)
        self.last_took_self_cond = take
        if take:
            # torch.no_grad() + detach_() only affect backward; the fused kernel's
            # forward values are identical to the two sequential model calls.
            return self.model.forward_self_cond_fused(
                net_input, node_flags, neg_cond, **model_kwargs)
        return self.model(net_input, node_flags, neg_cond, None, **model_kwargs)


# -----------------------------------------------------------------------------
# Host-side float64 reference (two explicit passes, as in the PyTorch wrapper)
# -----------------------------------------------------------------------------
def _reference_numpy(params, net_input, node_flags, neg_cond, took_self_cond):
    x = np.asarray(net_input, np.float64)
    flags = np.asarray(node_flags, np.float64)[..., None]
    cond = np.asarray(neg_cond, np.float64)
    w_in = np.asarray(params["w_in"], np.float64)
    w_sc = np.asarray(params["w_sc"], np.float64)
    w_cond = np.asarray(params["w_cond"], np.float64)
    b1 = np.asarray(params["b1"], np.float64)
    w_out = np.asarray(params["w_out"], np.float64)
    b2 = np.asarray(params["b2"], np.float64)

    def inner(sc):
        h = x @ w_in + sc @ w_sc + (cond @ w_cond)[:, None, :] + b1[None]
        h = np.maximum(h, 0.0)
        return (h @ w_out + b2[None]) * flags

    sc0 = np.zeros((x.shape[0], x.shape[1], D_OUT))
    sc = inner(sc0) if took_self_cond else sc0
    return inner(sc)


if __name__ == "__main__":
    # Deterministic parameter init (synthetic; not loaded from a checkpoint).
    key = jax.random.PRNGKey(0)
    ks = jax.random.split(key, 8)
    params = {
        "w_in":   jax.random.normal(ks[0], (D_IN, HIDDEN), jnp.float32) * 0.05,
        "w_sc":   jax.random.normal(ks[1], (D_OUT, HIDDEN), jnp.float32) * 0.05,
        "w_cond": jax.random.normal(ks[2], (D_COND, HIDDEN), jnp.float32) * 0.05,
        "b1":     jax.random.normal(ks[7], (1, HIDDEN), jnp.float32) * 0.01,
        "w_out":  jax.random.normal(ks[3], (HIDDEN, D_OUT), jnp.float32) * 0.05,
        "b2":     jax.random.normal(ks[5], (1, D_OUT), jnp.float32) * 0.01,
    }

    # Deterministic inputs.
    net_input = jax.random.normal(ks[4], (B, N, D_IN), jnp.float32)
    node_flags = (jax.random.uniform(ks[5], (B, N)) > 0.2).astype(jnp.float32)
    neg_cond = jax.random.normal(ks[6], (B, D_COND), jnp.float32)

    # Deterministic host-side coin flips (np.random.rand() < 0.5, as in PyTorch).
    np.random.seed(42)  # draw 1 = 0.3745 (< 0.5: fused self-cond), draw 2 = 0.9507 (plain)

    model = InnerModel(params)
    wrapper = SelfCondWrapper(model, self_condition=True)

    for _ in range(2):  # exercise both paths: fused self-cond pass and plain pass
        out = jax.block_until_ready(wrapper(net_input, node_flags, neg_cond))
        assert out.shape == (B, N, D_OUT)
        assert bool(jnp.all(jnp.isfinite(out)))
        ref = _reference_numpy(params, net_input, node_flags, neg_cond,
                               wrapper.last_took_self_cond)
        # Tight tolerance: catches any regression in the weight-slab / bias-fold packing.
        np.testing.assert_allclose(np.asarray(out), ref, rtol=1e-5, atol=1e-6)

    print("KERNEL_OK")
</pallas_src>

<mosaic_0001>
module attributes {stable_mosaic.version = 11 : i64} {
  func.func @_fused_selfcond_kernel(%arg0: memref<16x256xf32, #tpu.memory_space<vmem>>, %arg1: memref<384x128xf32, #tpu.memory_space<vmem>>, %arg2: memref<16x128xf32, #tpu.memory_space<vmem>>) attributes {dimension_semantics = [], scalar_prefetch = 0 : i64, scratch_operands = 0 : i64, tpu.core_type = #tpu.core_type<tc>} {
    %c0 = arith.constant 0 : index
    %c0_0 = arith.constant 0 : index
    %0 = vector.load %arg0[%c0, %c0_0] : memref<16x256xf32, #tpu.memory_space<vmem>>, vector<16x128xf32>
    %c0_1 = arith.constant 0 : index
    %c128 = arith.constant 128 : index
    %1 = vector.load %arg0[%c0_1, %c128] : memref<16x256xf32, #tpu.memory_space<vmem>>, vector<16x128xf32>
    %c0_2 = arith.constant 0 : index
    %c0_3 = arith.constant 0 : index
    %2 = vector.load %arg1[%c0_2, %c0_3] : memref<384x128xf32, #tpu.memory_space<vmem>>, vector<128x128xf32>
    %c128_4 = arith.constant 128 : index
    %c0_5 = arith.constant 0 : index
    %3 = vector.load %arg1[%c128_4, %c0_5] : memref<384x128xf32, #tpu.memory_space<vmem>>, vector<128x128xf32>
    %c256 = arith.constant 256 : index
    %c0_6 = arith.constant 0 : index
    %4 = vector.load %arg1[%c256, %c0_6] : memref<384x128xf32, #tpu.memory_space<vmem>>, vector<128x128xf32>
    %cst = arith.constant dense<0.000000e+00> : vector<16x128xf32>
    %5 = tpu.matmul %0, %2, %cst {dimension_numbers = #tpu.dot_dimension_numbers<[1], [0], [0], [1], [0, 0, 1, 1], [], []>} : vector<16x128xf32>, vector<128x128xf32>, vector<16x128xf32> -> vector<16x128xf32>
    %cst_7 = arith.constant 0.000000e+00 : f32
    %6 = vector.broadcast %cst_7 : f32 to vector<16x128xf32>
    %7 = arith.maximumf %5, %6 : vector<16x128xf32>
    %cst_8 = arith.constant dense<0.000000e+00> : vector<16x128xf32>
    %8 = tpu.matmul %7, %4, %cst_8 {dimension_numbers = #tpu.dot_dimension_numbers<[1], [0], [0], [1], [0, 0, 1, 1], [], []>} : vector<16x128xf32>, vector<128x128xf32>, vector<16x128xf32> -> vector<16x128xf32>
    %9 = arith.mulf %8, %1 : vector<16x128xf32>
    %cst_9 = arith.constant dense<0.000000e+00> : vector<16x128xf32>
    %10 = tpu.matmul %9, %3, %cst_9 {dimension_numbers = #tpu.dot_dimension_numbers<[1], [0], [0], [1], [0, 0, 1, 1], [], []>} : vector<16x128xf32>, vector<128x128xf32>, vector<16x128xf32> -> vector<16x128xf32>
    %11 = arith.addf %5, %10 : vector<16x128xf32>
    %cst_10 = arith.constant 0.000000e+00 : f32
    %12 = vector.broadcast %cst_10 : f32 to vector<16x128xf32>
    %13 = arith.maximumf %11, %12 : vector<16x128xf32>
    %cst_11 = arith.constant dense<0.000000e+00> : vector<16x128xf32>
    %14 = tpu.matmul %13, %4, %cst_11 {dimension_numbers = #tpu.dot_dimension_numbers<[1], [0], [0], [1], [0, 0, 1, 1], [], []>} : vector<16x128xf32>, vector<128x128xf32>, vector<16x128xf32> -> vector<16x128xf32>
    %15 = arith.mulf %14, %1 : vector<16x128xf32>
    %c0_12 = arith.constant 0 : index
    %c0_13 = arith.constant 0 : index
    %16 = vector.load %arg2[%c0_12, %c0_13] : memref<16x128xf32, #tpu.memory_space<vmem>>, vector<16x128xf32>
    tpu.vector_store %arg2[%c0_12, %c0_13], %15 {strides = array<i32>} : memref<16x128xf32, #tpu.memory_space<vmem>>, vector<16x128xf32>,
    return
  }
}

</mosaic_0001>

<llo_original>
// kernel: _forward_fused.1
$region0: #{_forward_fused.1}
  #allocation0 [shape = 'u32[]', space=smem, size = 0x4, offset = 0x4, fixed_abs, tag = 'smem constant byte address 0x4 - core index']
  #allocation1 [shape = 'u32[144,128]{1,0:T(1,128)}', space=vmem, size = 0x12000, scoped, tag = 'internal scratch']
  %s0 = inlined_call_operand.vmem [shape: f32[16,256], index: 0, kind: input, shape index: {}]
  %s1 = inlined_call_operand.hbm [shape: f32[384,128], index: 1, kind: input, shape index: {}]
  %s2 = inlined_call_operand.vmem [shape: f32[16,128], index: 2, kind: output, shape index: {}]
  %s3 = sld [smem:[#allocation0]]
  $region22: #{_forward_fused.1} parent=0
    _
  %s5 = ssub.s32 1, %s3
  %s6 = scalar_select 0, %s5, %s3
  $region1: #{_forward_fused.1} parent=0
    #allocation2 [shape = 'u8[196608]{0}', space=vmem, size = 0x30000, scoped, tag = 'input window, operand 1, single buffered']
    #allocation3 [shape = 's32[1]{0}', space=sflag, size = 0x4, scoped, tag = 'scoped memory for _forward_fused.1']
    %7 = vsyncpa [#allocation3], 0
    // Predicated region
    $region2: #{_forward_fused.1} parent=1 // pred_check
      _
    $region3: #{_forward_fused.1} parent=1 // pred_check_branch
      %9 = sbr.rel (0) target = $region5
    $region4: #{_forward_fused.1} parent=1 // pred_region
      _
    $region5: #{_forward_fused.1} parent=1 // pred_fallthru
      _
    // Predicated region
    $region6: #{_forward_fused.1} parent=1 // pred_check
      _
    $region7: #{_forward_fused.1} parent=1 // pred_check_branch
      %11 = sbr.rel (0) target = $region9
    $region8: #{_forward_fused.1} parent=1 // pred_region
      %s13 = ssub.s32 6144, 6144
      %14 = vsyncadd [#allocation3], %s13
      %s15 = sshll.u32 [#allocation2], 4
      %s16 = int_to_ptr.vmem [resolvable:$true] %s15
      %21 = dma.hbm_to_vmem [thread:$0]  %s1, 6144, %s16, [#allocation3], 128, 128, 8
    $region9: #{_forward_fused.1} parent=1 // pred_fallthru
      _
    // Predicated region
    $region10: #{_forward_fused.1} parent=1 // pred_check
      _
    $region11: #{_forward_fused.1} parent=1 // pred_check_branch
      %23 = sbr.rel (0) target = $region13
    $region12: #{_forward_fused.1} parent=1 // pred_region
      %24 = dma.done [#allocation3], 6144
    $region13: #{_forward_fused.1} parent=1 // pred_fallthru
      _
    %v25 = vld [vmem:[%s0] sm:$0xff]
    %v26 = vld [vmem:[%s0 + $0x10] sm:$0xff]
    %v27 = vld [vmem:[%s0 + $0x8] sm:$0xff]
    %v28 = vld [vmem:[%s0 + $0x18] sm:$0xff]
    %v29 = vld [vmem:[#allocation2] sm:$0xff]
    %v30 = vld [vmem:[#allocation2 + $0x8] sm:$0xff]
    %v31 = vld [vmem:[#allocation2 + $0x10] sm:$0xff]
    %v32 = vld [vmem:[#allocation2 + $0x18] sm:$0xff]
    %v33 = vld [vmem:[#allocation2 + $0x20] sm:$0xff]
    %v34 = vld [vmem:[#allocation2 + $0x28] sm:$0xff]
    %v35 = vld [vmem:[#allocation2 + $0x30] sm:$0xff]
    %v36 = vld [vmem:[#allocation2 + $0x38] sm:$0xff]
    %v37 = vld [vmem:[#allocation2 + $0x40] sm:$0xff]
    %v38 = vld [vmem:[#allocation2 + $0x48] sm:$0xff]
    %v39 = vld [vmem:[#allocation2 + $0x50] sm:$0xff]
    %v40 = vld [vmem:[#allocation2 + $0x58] sm:$0xff]
    %v41 = vld [vmem:[#allocation2 + $0x60] sm:$0xff]
    %v42 = vld [vmem:[#allocation2 + $0x68] sm:$0xff]
    %v43 = vld [vmem:[#allocation2 + $0x70] sm:$0xff]
    %v44 = vld [vmem:[#allocation2 + $0x78] sm:$0xff]
    %v45 = vld [vmem:[#allocation2 + $0x80] sm:$0xff]
    %v46 = vld [vmem:[#allocation2 + $0x88] sm:$0xff]
    %v47 = vld [vmem:[#allocation2 + $0x90] sm:$0xff]
    %v48 = vld [vmem:[#allocation2 + $0x98] sm:$0xff]
    %v49 = vld [vmem:[#allocation2 + $0xa0] sm:$0xff]
    %v50 = vld [vmem:[#allocation2 + $0xa8] sm:$0xff]
    %v51 = vld [vmem:[#allocation2 + $0xb0] sm:$0xff]
    %v52 = vld [vmem:[#allocation2 + $0xb8] sm:$0xff]
    %v53 = vld [vmem:[#allocation2 + $0xc0] sm:$0xff]
    %v54 = vld [vmem:[#allocation2 + $0xc8] sm:$0xff]
    %v55 = vld [vmem:[#allocation2 + $0xd0] sm:$0xff]
    %v56 = vld [vmem:[#allocation2 + $0xd8] sm:$0xff]
    %v57 = vld [vmem:[#allocation2 + $0xe0] sm:$0xff]
    %v58 = vld [vmem:[#allocation2 + $0xe8] sm:$0xff]
    %v59 = vld [vmem:[#allocation2 + $0xf0] sm:$0xff]
    %v60 = vld [vmem:[#allocation2 + $0xf8] sm:$0xff]
    %v61 = vld [vmem:[#allocation2 + $0x100] sm:$0xff]
    %v62 = vld [vmem:[#allocation2 + $0x108] sm:$0xff]
    %v63 = vld [vmem:[#allocation2 + $0x110] sm:$0xff]
    %v64 = vld [vmem:[#allocation2 + $0x118] sm:$0xff]
    %v65 = vld [vmem:[#allocation2 + $0x120] sm:$0xff]
    %v66 = vld [vmem:[#allocation2 + $0x128] sm:$0xff]
    %v67 = vld [vmem:[#allocation2 + $0x130] sm:$0xff]
    %v68 = vld [vmem:[#allocation2 + $0x138] sm:$0xff]
    %v69 = vld [vmem:[#allocation2 + $0x140] sm:$0xff]
    %v70 = vld [vmem:[#allocation2 + $0x148] sm:$0xff]
    %v71 = vld [vmem:[#allocation2 + $0x150] sm:$0xff]
    %v72 = vld [vmem:[#allocation2 + $0x158] sm:$0xff]
    %v73 = vld [vmem:[#allocation2 + $0x160] sm:$0xff]
    %v74 = vld [vmem:[#allocation2 + $0x168] sm:$0xff]
    %v75 = vld [vmem:[#allocation2 + $0x170] sm:$0xff]
    %v76 = vld [vmem:[#allocation2 + $0x178] sm:$0xff]
    %77 = vmatprep.subr.mxu0 0.0
    %78 = vmatpush1.msra.mxu0 %v44
    %79 = vmatprep.subr.mxu0 0.0
    %80 = vmatpush1.msra.mxu0 %v43
    %81 = vmatprep.subr.mxu0 0.0
    %82 = vmatpush1.msra.mxu0 %v42
    %83 = vmatprep.subr.mxu0 0.0
    %84 = vmatpush1.msra.mxu0 %v41
    %85 = vmatprep.subr.mxu0 0.0
    %86 = vmatpush1.msra.mxu0 %v40
    %87 = vmatprep.subr.mxu0 0.0
    %88 = vmatpush1.msra.mxu0 %v39
    %89 = vmatprep.subr.mxu0 0.0
    %90 = vmatpush1.msra.mxu0 %v38
    %91 = vmatprep.subr.mxu0 0.0
    %92 = vmatpush1.msra.mxu0 %v37
    %93 = vmatprep.subr.mxu0 0.0
    %94 = vmatpush1.msra.mxu0 %v36
    %95 = vmatprep.subr.mxu0 0.0
    %96 = vmatpush1.msra.mxu0 %v35
    %97 = vmatprep.subr.mxu0 0.0
    %98 = vmatpush1.msra.mxu0 %v34
    %99 = vmatprep.subr.mxu0 0.0
    %100 = vmatpush1.msra.mxu0 %v33
    %101 = vmatprep.subr.mxu0 0.0
    %102 = vmatpush1.msra.mxu0 %v32
    %103 = vmatprep.subr.mxu0 0.0
    %104 = vmatpush1.msra.mxu0 %v31
    %105 = vmatprep.subr.mxu0 0.0
    %106 = vmatpush1.msra.mxu0 %v30
    %107 = vmatprep.subr.mxu0 0.0
    %108 = vmatpush1.msra.mxu0 %v29
    %109 = vmatprep.subr.mxu0 0.0
    %110 = vmatpush2.msra.mxu0 0.0
    %111 = vmatprep.subr.mxu0 0.0
    %112 = vmatpush2.msra.mxu0 0.0
    %113 = vmatprep.subr.mxu0 0.0
    %114 = vmatpush2.msra.mxu0 0.0
    %115 = vmatprep.subr.mxu0 0.0
    %116 = vmatpush2.msra.mxu0 0.0
    %117 = vmatprep.subr.mxu0 0.0
    %118 = vmatpush2.msra.mxu0 0.0
    %119 = vmatprep.subr.mxu0 0.0
    %120 = vmatpush2.msra.mxu0 0.0
    %121 = vmatprep.subr.mxu0 0.0
    %122 = vmatpush2.msra.mxu0 0.0
    %123 = vmatprep.subr.mxu0 0.0
    %124 = vmatpush2.msra.mxu0 0.0
    %125 = vmatprep.subr.mxu0 0.0
    %126 = vmatpush2.msra.mxu0 0.0
    %127 = vmatprep.subr.mxu0 0.0
    %128 = vmatpush2.msra.mxu0 0.0
    %129 = vmatprep.subr.mxu0 0.0
    %130 = vmatpush2.msra.mxu0 0.0
    %131 = vmatprep.subr.mxu0 0.0
    %132 = vmatpush2.msra.mxu0 0.0
    %133 = vmatprep.subr.mxu0 0.0
    %134 = vmatpush2.msra.mxu0 0.0
    %135 = vmatprep.subr.mxu0 0.0
    %136 = vmatpush2.msra.mxu0 0.0
    %137 = vmatprep.subr.mxu0 0.0
    %138 = vmatpush2.msra.mxu0 0.0
    %139 = vmatprep.subr.mxu0 0.0
    %140 = vmatpush2.msra.mxu0 0.0
    %141 = vmatprep.mubr.f32.mxu0 0.0
    %142 = vmatmul.mubr.f32.gmra.mxu0 %v25
    %v143 = vpop.f32.mrf.mxu0
    %v144 = vadd.f32 0.0, %v143
    %v145 = vpop.f32.mrf.mxu0
    %146 = vmatprep.mubr.f32.mxu0 0.0
    %147 = vmatmul.mubr.f32.gmra.mxu0 %v26
    %v148 = vpop.f32.mrf.mxu0
    %v149 = vadd.f32 0.0, %v148
    %v150 = vpop.f32.mrf.mxu0
    %151 = vdwg.mxu0
    %v152 = vmax.f32 %v144, 0.0
    %v153 = vmax.f32 %v149, 0.0
    %154 = vmatprep.subr.mxu0 0.0
    %155 = vmatpush1.msra.mxu0 %v76
    %156 = vmatprep.subr.mxu0 0.0
    %157 = vmatpush1.msra.mxu0 %v75
    %158 = vmatprep.subr.mxu0 0.0
    %159 = vmatpush1.msra.mxu0 %v74
    %160 = vmatprep.subr.mxu0 0.0
    %161 = vmatpush1.msra.mxu0 %v73
    %162 = vmatprep.subr.mxu0 0.0
    %163 = vmatpush1.msra.mxu0 %v72
    %164 = vmatprep.subr.mxu0 0.0
    %165 = vmatpush1.msra.mxu0 %v71
    %166 = vmatprep.subr.mxu0 0.0
    %167 = vmatpush1.msra.mxu0 %v70
    %168 = vmatprep.subr.mxu0 0.0
    %169 = vmatpush1.msra.mxu0 %v69
    %170 = vmatprep.subr.mxu0 0.0
    %171 = vmatpush1.msra.mxu0 %v68
    %172 = vmatprep.subr.mxu0 0.0
    %173 = vmatpush1.msra.mxu0 %v67
    %174 = vmatprep.subr.mxu0 0.0
    %175 = vmatpush1.msra.mxu0 %v66
    %176 = vmatprep.subr.mxu0 0.0
    %177 = vmatpush1.msra.mxu0 %v65
    %178 = vmatprep.subr.mxu0 0.0
    %179 = vmatpush1.msra.mxu0 %v64
    %180 = vmatprep.subr.mxu0 0.0
    %181 = vmatpush1.msra.mxu0 %v63
    %182 = vmatprep.subr.mxu0 0.0
    %183 = vmatpush1.msra.mxu0 %v62
    %184 = vmatprep.subr.mxu0 0.0
    %185 = vmatpush1.msra.mxu0 %v61
    %186 = vmatprep.subr.mxu0 0.0
    %187 = vmatpush2.msra.mxu0 0.0
    %188 = vmatprep.subr.mxu0 0.0
    %189 = vmatpush2.msra.mxu0 0.0
    %190 = vmatprep.subr.mxu0 0.0
    %191 = vmatpush2.msra.mxu0 0.0
    %192 = vmatprep.subr.mxu0 0.0
    %193 = vmatpush2.msra.mxu0 0.0
    %194 = vmatprep.subr.mxu0 0.0
    %195 = vmatpush2.msra.mxu0 0.0
    %196 = vmatprep.subr.mxu0 0.0
    %197 = vmatpush2.msra.mxu0 0.0
    %198 = vmatprep.subr.mxu0 0.0
    %199 = vmatpush2.msra.mxu0 0.0
    %200 = vmatprep.subr.mxu0 0.0
    %201 = vmatpush2.msra.mxu0 0.0
    %202 = vmatprep.subr.mxu0 0.0
    %203 = vmatpush2.msra.mxu0 0.0
    %204 = vmatprep.subr.mxu0 0.0
    %205 = vmatpush2.msra.mxu0 0.0
    %206 = vmatprep.subr.mxu0 0.0
    %207 = vmatpush2.msra.mxu0 0.0
    %208 = vmatprep.subr.mxu0 0.0
    %209 = vmatpush2.msra.mxu0 0.0
    %210 = vmatprep.subr.mxu0 0.0
    %211 = vmatpush2.msra.mxu0 0.0
    %212 = vmatprep.subr.mxu0 0.0
    %213 = vmatpush2.msra.mxu0 0.0
    %214 = vmatprep.subr.mxu0 0.0
    %215 = vmatpush2.msra.mxu0 0.0
    %216 = vmatprep.subr.mxu0 0.0
    %217 = vmatpush2.msra.mxu0 0.0
    %218 = vmatprep.mubr.f32.mxu0 0.0
    %219 = vmatmul.mubr.f32.gmra.mxu0 %v152
    %v220 = vpop.f32.mrf.mxu0
    %v221 = vadd.f32 0.0, %v220
    %v222 = vpop.f32.mrf.mxu0
    %223 = vmatprep.mubr.f32.mxu0 0.0
    %224 = vmatmul.mubr.f32.gmra.mxu0 %v153
    %v225 = vpop.f32.mrf.mxu0
    %v226 = vadd.f32 0.0, %v225
    %v227 = vpop.f32.mrf.mxu0
    %228 = vdwg.mxu0
    %v229 = vmul.f32 %v221, %v27
    %v230 = vmul.f32 %v226, %v28
    %231 = vmatprep.subr.mxu0 0.0
    %232 = vmatpush1.msra.mxu0 %v60
    %233 = vmatprep.subr.mxu0 0.0
    %234 = vmatpush1.msra.mxu0 %v59
    %235 = vmatprep.subr.mxu0 0.0
    %236 = vmatpush1.msra.mxu0 %v58
    %237 = vmatprep.subr.mxu0 0.0
    %238 = vmatpush1.msra.mxu0 %v57
    %239 = vmatprep.subr.mxu0 0.0
    %240 = vmatpush1.msra.mxu0 %v56
    %241 = vmatprep.subr.mxu0 0.0
    %242 = vmatpush1.msra.mxu0 %v55
    %243 = vmatprep.subr.mxu0 0.0
    %244 = vmatpush1.msra.mxu0 %v54
    %245 = vmatprep.subr.mxu0 0.0
    %246 = vmatpush1.msra.mxu0 %v53
    %247 = vmatprep.subr.mxu0 0.0
    %248 = vmatpush1.msra.mxu0 %v52
    %249 = vmatprep.subr.mxu0 0.0
    %250 = vmatpush1.msra.mxu0 %v51
    %251 = vmatprep.subr.mxu0 0.0
    %252 = vmatpush1.msra.mxu0 %v50
    %253 = vmatprep.subr.mxu0 0.0
    %254 = vmatpush1.msra.mxu0 %v49
    %255 = vmatprep.subr.mxu0 0.0
    %256 = vmatpush1.msra.mxu0 %v48
    %257 = vmatprep.subr.mxu0 0.0
    %258 = vmatpush1.msra.mxu0 %v47
    %259 = vmatprep.subr.mxu0 0.0
    %260 = vmatpush1.msra.mxu0 %v46
    %261 = vmatprep.subr.mxu0 0.0
    %262 = vmatpush1.msra.mxu0 %v45
    %263 = vmatprep.subr.mxu0 0.0
    %264 = vmatpush2.msra.mxu0 0.0
    %265 = vmatprep.subr.mxu0 0.0
    %266 = vmatpush2.msra.mxu0 0.0
    %267 = vmatprep.subr.mxu0 0.0
    %268 = vmatpush2.msra.mxu0 0.0
    %269 = vmatprep.subr.mxu0 0.0
    %270 = vmatpush2.msra.mxu0 0.0
    %271 = vmatprep.subr.mxu0 0.0
    %272 = vmatpush2.msra.mxu0 0.0
    %273 = vmatprep.subr.mxu0 0.0
    %274 = vmatpush2.msra.mxu0 0.0
    %275 = vmatprep.subr.mxu0 0.0
    %276 = vmatpush2.msra.mxu0 0.0
    %277 = vmatprep.subr.mxu0 0.0
    %278 = vmatpush2.msra.mxu0 0.0
    %279 = vmatprep.subr.mxu0 0.0
    %280 = vmatpush2.msra.mxu0 0.0
    %281 = vmatprep.subr.mxu0 0.0
    %282 = vmatpush2.msra.mxu0 0.0
    %283 = vmatprep.subr.mxu0 0.0
    %284 = vmatpush2.msra.mxu0 0.0
    %285 = vmatprep.subr.mxu0 0.0
    %286 = vmatpush2.msra.mxu0 0.0
    %287 = vmatprep.subr.mxu0 0.0
    %288 = vmatpush2.msra.mxu0 0.0
    %289 = vmatprep.subr.mxu0 0.0
    %290 = vmatpush2.msra.mxu0 0.0
    %291 = vmatprep.subr.mxu0 0.0
    %292 = vmatpush2.msra.mxu0 0.0
    %293 = vmatprep.subr.mxu0 0.0
    %294 = vmatpush2.msra.mxu0 0.0
    %295 = vmatprep.mubr.f32.mxu0 0.0
    %296 = vmatmul.mubr.f32.gmra.mxu0 %v229
    %v297 = vpop.f32.mrf.mxu0
    %v298 = vadd.f32 0.0, %v297
    %v299 = vpop.f32.mrf.mxu0
    %300 = vmatprep.mubr.f32.mxu0 0.0
    %301 = vmatmul.mubr.f32.gmra.mxu0 %v230
    %v302 = vpop.f32.mrf.mxu0
    %v303 = vadd.f32 0.0, %v302
    %v304 = vpop.f32.mrf.mxu0
    %305 = vdwg.mxu0
    %v306 = vadd.f32 %v144, %v298
    %v307 = vadd.f32 %v149, %v303
    %v308 = vmax.f32 %v306, 0.0
    %v309 = vmax.f32 %v307, 0.0
    %310 = vmatprep.subr.mxu0 0.0
    %311 = vmatpush1.msra.mxu0 %v76
    %312 = vmatprep.subr.mxu0 0.0
    %313 = vmatpush1.msra.mxu0 %v75
    %314 = vmatprep.subr.mxu0 0.0
    %315 = vmatpush1.msra.mxu0 %v74
    %316 = vmatprep.subr.mxu0 0.0
    %317 = vmatpush1.msra.mxu0 %v73
    %318 = vmatprep.subr.mxu0 0.0
    %319 = vmatpush1.msra.mxu0 %v72
    %320 = vmatprep.subr.mxu0 0.0
    %321 = vmatpush1.msra.mxu0 %v71
    %322 = vmatprep.subr.mxu0 0.0
    %323 = vmatpush1.msra.mxu0 %v70
    %324 = vmatprep.subr.mxu0 0.0
    %325 = vmatpush1.msra.mxu0 %v69
    %326 = vmatprep.subr.mxu0 0.0
    %327 = vmatpush1.msra.mxu0 %v68
    %328 = vmatprep.subr.mxu0 0.0
    %329 = vmatpush1.msra.mxu0 %v67
    %330 = vmatprep.subr.mxu0 0.0
    %331 = vmatpush1.msra.mxu0 %v66
    %332 = vmatprep.subr.mxu0 0.0
    %333 = vmatpush1.msra.mxu0 %v65
    %334 = vmatprep.subr.mxu0 0.0
    %335 = vmatpush1.msra.mxu0 %v64
    %336 = vmatprep.subr.mxu0 0.0
    %337 = vmatpush1.msra.mxu0 %v63
    %338 = vmatprep.subr.mxu0 0.0
    %339 = vmatpush1.msra.mxu0 %v62
    %340 = vmatprep.subr.mxu0 0.0
    %341 = vmatpush1.msra.mxu0 %v61
    %342 = vmatprep.subr.mxu0 0.0
    %343 = vmatpush2.msra.mxu0 0.0
    %344 = vmatprep.subr.mxu0 0.0
    %345 = vmatpush2.msra.mxu0 0.0
    %346 = vmatprep.subr.mxu0 0.0
    %347 = vmatpush2.msra.mxu0 0.0
    %348 = vmatprep.subr.mxu0 0.0
    %349 = vmatpush2.msra.mxu0 0.0
    %350 = vmatprep.subr.mxu0 0.0
    %351 = vmatpush2.msra.mxu0 0.0
    %352 = vmatprep.subr.mxu0 0.0
    %353 = vmatpush2.msra.mxu0 0.0
    %354 = vmatprep.subr.mxu0 0.0
    %355 = vmatpush2.msra.mxu0 0.0
    %356 = vmatprep.subr.mxu0 0.0
    %357 = vmatpush2.msra.mxu0 0.0
    %358 = vmatprep.subr.mxu0 0.0
    %359 = vmatpush2.msra.mxu0 0.0
    %360 = vmatprep.subr.mxu0 0.0
    %361 = vmatpush2.msra.mxu0 0.0
    %362 = vmatprep.subr.mxu0 0.0
    %363 = vmatpush2.msra.mxu0 0.0
    %364 = vmatprep.subr.mxu0 0.0
    %365 = vmatpush2.msra.mxu0 0.0
    %366 = vmatprep.subr.mxu0 0.0
    %367 = vmatpush2.msra.mxu0 0.0
    %368 = vmatprep.subr.mxu0 0.0
    %369 = vmatpush2.msra.mxu0 0.0
    %370 = vmatprep.subr.mxu0 0.0
    %371 = vmatpush2.msra.mxu0 0.0
    %372 = vmatprep.subr.mxu0 0.0
    %373 = vmatpush2.msra.mxu0 0.0
    %374 = vmatprep.mubr.f32.mxu0 0.0
    %375 = vmatmul.mubr.f32.gmra.mxu0 %v308
    %v376 = vpop.f32.mrf.mxu0
    %v377 = vadd.f32 0.0, %v376
    %v378 = vpop.f32.mrf.mxu0
    %379 = vmatprep.mubr.f32.mxu0 0.0
    %380 = vmatmul.mubr.f32.gmra.mxu0 %v309
    %v381 = vpop.f32.mrf.mxu0
    %v382 = vadd.f32 0.0, %v381
    %v383 = vpop.f32.mrf.mxu0
    %384 = vdwg.mxu0
    %v385 = vmul.f32 %v377, %v27
    %v386 = vmul.f32 %v382, %v28
    %387 = vst [vmem:[%s2] sm:$0xff] %v385
    %388 = vst [vmem:[%s2 + $0x8] sm:$0xff] %v386
    // Predicated region
    $region14: #{_forward_fused.1} parent=1 // pred_check
      _
    $region15: #{_forward_fused.1} parent=1 // pred_check_branch
      %390 = sbr.rel (0) target = $region17
    $region16: #{_forward_fused.1} parent=1 // pred_region
      _
    $region17: #{_forward_fused.1} parent=1 // pred_fallthru
      _
    // Predicated region
    $region18: #{_forward_fused.1} parent=1 // pred_check
      _
    $region19: #{_forward_fused.1} parent=1 // pred_check_branch
      %392 = sbr.rel (0) target = $region21
    $region20: #{_forward_fused.1} parent=1 // pred_region
      _
    $region21: #{_forward_fused.1} parent=1 // pred_fallthru
      _
    %393 = vsyncpa [#allocation3], 1

</llo_original>
